<compile_context>
chip_gen: v6e
topology: v6e:2x2x1
jax: 0.10.0
libtpu: 0.0.40
codegen_flags: <defaults>
</compile_context>

<pallas_src>
import numpy as np

import jax
import jax.numpy as jnp
from jax.experimental import pallas as pl
from jax.experimental.pallas import tpu as pltpu


# -----------------------------------------------------------------------------
# Fused Pallas kernel: CLS projection (matmul+bias+tanh) + all cosine scores
# -----------------------------------------------------------------------------
def _rank_kernel(ctx_emb_ref, cand_emb_ref, sel_ref, w_ref, b_ref, o_ref):
    # ctx_emb:  (B,  H_in)   context CLS embeddings
    # cand_emb: (Rp, H_in)   candidate CLS embeddings (candidate-major, padded)
    # sel:      (Rp, B)      constant 0/1 pairing matrix, sel[i, i % B] = 1
    # w:        (H_in, H_out), b: (1, H_out)
    # o:        (Rp, 128)    score column broadcast across all 128 lanes
    w = w_ref[...]
    bias = b_ref[...]

    # Single fused projection + tanh for context and all candidates.
    ctx = jnp.tanh(
        jnp.dot(ctx_emb_ref[...], w, preferred_element_type=jnp.float32) + bias
    )                                                                   # (B, H_out)
    cand = jnp.tanh(
        jnp.dot(cand_emb_ref[...], w, preferred_element_type=jnp.float32) + bias
    )                                                                   # (Rp, H_out)
    # NOTE(perf): for a real encoder (H=768+, large row counts) cast ctx/cand/w
    # to bfloat16 here (keep f32 accumulate) and row-tile with a parallel grid.

    sel = sel_ref[...]                                                  # (Rp, B)

    # Replicate context rows to candidate rows via the MXU (constant 0/1 matmul)
    # and hoist the context squared norm: computed ONCE, then routed per row.
    ctx_rows = jnp.dot(sel, ctx, preferred_element_type=jnp.float32)    # (Rp, H_out)
    ctx_sq = jnp.sum(ctx * ctx, axis=-1, keepdims=True)                 # (B, 1)
    ctx_sq_rows = jnp.dot(sel, ctx_sq, preferred_element_type=jnp.float32)  # (Rp, 1)

    dots = jnp.sum(ctx_rows * cand, axis=-1, keepdims=True)             # (Rp, 1)
    cand_sq = jnp.sum(cand * cand, axis=-1, keepdims=True)              # (Rp, 1)

    eps = jnp.float32(1e-8)  # torch.nn.CosineSimilarity default eps
    denom = jnp.maximum(jnp.sqrt(ctx_sq_rows) * jnp.sqrt(cand_sq), eps)
    scores = dots / denom                                               # (Rp, 1)

    # Lane-dense store: one full (Rp, 128) block, no masked lane stores.
    o_ref[...] = jnp.broadcast_to(scores, o_ref.shape)


# -----------------------------------------------------------------------------
# Wrapper: one pallas_call scores all candidates against the context
# -----------------------------------------------------------------------------
def rank_scores(ctx_emb, cand_emb, w, b, num_cand, batch):
    h_in, h_out = w.shape
    cb = num_cand * batch
    rp = max(8, ((cb + 7) // 8) * 8)            # sublane-pad candidate rows
    pad = rp - cb
    if pad:
        cand_emb = jnp.concatenate(
            [cand_emb, jnp.zeros((pad, h_in), cand_emb.dtype)], axis=0)

    # Constant pairing matrix: candidate row i pairs with context row (i % B).
    sel_np = np.zeros((rp, batch), np.float32)
    sel_np[np.arange(cb), np.arange(cb) % batch] = 1.0   # pad rows stay zero
    sel = jnp.asarray(sel_np)

    b2d = b.reshape(1, h_out)

    out = pl.pallas_call(
        _rank_kernel,
        out_shape=jax.ShapeDtypeStruct((rp, 128), jnp.float32),
        grid=(1,),
        in_specs=[
            pl.BlockSpec((batch, h_in), lambda i: (0, 0)),
            pl.BlockSpec((rp, h_in), lambda i: (0, 0)),
            pl.BlockSpec((rp, batch), lambda i: (0, 0)),
            pl.BlockSpec((h_in, h_out), lambda i: (0, 0)),
            pl.BlockSpec((1, h_out), lambda i: (0, 0)),
        ],
        out_specs=pl.BlockSpec((rp, 128), lambda i: (0, 0)),
        compiler_params=pltpu.CompilerParams(
            dimension_semantics=("arbitrary",)),
    )(ctx_emb, cand_emb, sel, w, b2d)

    # Lane 0 carries the scores; rows beyond cb are padding.
    return out[:cb, 0].reshape(num_cand, batch)


# -----------------------------------------------------------------------------
# Module forward
# -----------------------------------------------------------------------------
def rank_using_previous_context(context_ids, step_ids_list, neg_step_ids_list,
                                params, num_random_steps, use_contrastive):
    cand_lists = list(step_ids_list[:num_random_steps])
    if use_contrastive:
        cand_lists = cand_lists + list(neg_step_ids_list[:num_random_steps])
    num_cand = len(cand_lists)
    batch = context_ids.shape[0]

    # Embedding gather (glue): CLS tokens only -> (1 + num_cand) * B rows total.
    ctx_emb = params["embed"][context_ids[:, 0]]                        # (B, H)
    cand_cls = jnp.stack([ids[:, 0] for ids in cand_lists], axis=0)     # (C, B)
    cand_emb = params["embed"][cand_cls.reshape(-1)]                    # (C*B, H)

    scores = rank_scores(ctx_emb, cand_emb, params["w"], params["b"],
                         num_cand, batch)                               # (C, B)
    # Same list structure/order as the PyTorch forward (positives, then negs).
    return [scores[i] for i in range(num_cand)]


# -----------------------------------------------------------------------------
# Main
# -----------------------------------------------------------------------------
if __name__ == "__main__":
    BATCH = 2
    CONTEXT_STEPS = 16   # context max_length
    MAX_STEP_LEN = 8     # step max_length
    HIDDEN = 32
    VOCAB = 64
    NUM_RANDOM_STEPS = 3
    USE_CONTRASTIVE = True

    key = jax.random.PRNGKey(0)
    k_emb, k_w, k_b, k_ctx, k_step, k_neg = jax.random.split(key, 6)

    params = {
        "embed": jax.random.normal(k_emb, (VOCAB, HIDDEN), jnp.float32) * 0.02,
        "w": jax.random.normal(k_w, (HIDDEN, HIDDEN), jnp.float32) * 0.1,
        "b": jax.random.normal(k_b, (HIDDEN,), jnp.float32) * 0.01,
    }

    context_ids = jax.random.randint(
        k_ctx, (BATCH, CONTEXT_STEPS), 0, VOCAB, jnp.int32)
    step_keys = jax.random.split(k_step, NUM_RANDOM_STEPS)
    neg_keys = jax.random.split(k_neg, NUM_RANDOM_STEPS)
    step_ids_list = [
        jax.random.randint(step_keys[i], (BATCH, MAX_STEP_LEN), 0, VOCAB, jnp.int32)
        for i in range(NUM_RANDOM_STEPS)
    ]
    neg_step_ids_list = [
        jax.random.randint(neg_keys[i], (BATCH, MAX_STEP_LEN), 0, VOCAB, jnp.int32)
        for i in range(NUM_RANDOM_STEPS)
    ]

    fwd = jax.jit(rank_using_previous_context, static_argnums=(4, 5))
    scores = fwd(context_ids, step_ids_list, neg_step_ids_list,
                 params, NUM_RANDOM_STEPS, USE_CONTRASTIVE)

    scores = [jax.block_until_ready(s) for s in scores]
    assert len(scores) == NUM_RANDOM_STEPS * (2 if USE_CONTRASTIVE else 1)
    assert all(s.shape == (BATCH,) for s in scores)
    assert all(bool(jnp.all(jnp.isfinite(s))) for s in scores)
    print("KERNEL_OK")
</pallas_src>

<mosaic_0001>
module attributes {stable_mosaic.version = 11 : i64} {
  func.func @_rank_kernel(%arg0: i32, %arg1: memref<2x32xf32, #tpu.memory_space<vmem>>, %arg2: memref<16x32xf32, #tpu.memory_space<vmem>>, %arg3: memref<16x2xf32, #tpu.memory_space<vmem>>, %arg4: memref<32x32xf32, #tpu.memory_space<vmem>>, %arg5: memref<1x32xf32, #tpu.memory_space<vmem>>, %arg6: memref<16x128xf32, #tpu.memory_space<vmem>>) attributes {dimension_semantics = [#tpu.dimension_semantics<arbitrary>], iteration_bounds = array<i64: 1>, scalar_prefetch = 0 : i64, scratch_operands = 0 : i64, tpu.core_type = #tpu.core_type<tc>, window_params = [{pipeline_mode = #tpu.pipeline_mode<synchronous>, transform_indices = @transform_0, window_bounds = array<i64: 2, 32>}, {pipeline_mode = #tpu.pipeline_mode<synchronous>, transform_indices = @transform_1, window_bounds = array<i64: 16, 32>}, {pipeline_mode = #tpu.pipeline_mode<synchronous>, transform_indices = @transform_2, window_bounds = array<i64: 16, 2>}, {pipeline_mode = #tpu.pipeline_mode<synchronous>, transform_indices = @transform_3, window_bounds = array<i64: 32, 32>}, {pipeline_mode = #tpu.pipeline_mode<synchronous>, transform_indices = @transform_4, window_bounds = array<i64: 1, 32>}, {pipeline_mode = #tpu.pipeline_mode<synchronous>, transform_indices = @transform_5, window_bounds = array<i64: 16, 128>}]} {
    %c0 = arith.constant 0 : index
    %c0_0 = arith.constant 0 : index
    %0 = vector.load %arg4[%c0, %c0_0] : memref<32x32xf32, #tpu.memory_space<vmem>>, vector<32x32xf32>
    %c0_1 = arith.constant 0 : index
    %c0_2 = arith.constant 0 : index
    %1 = vector.load %arg5[%c0_1, %c0_2] : memref<1x32xf32, #tpu.memory_space<vmem>>, vector<1x32xf32>
    %c0_3 = arith.constant 0 : index
    %c0_4 = arith.constant 0 : index
    %2 = vector.load %arg1[%c0_3, %c0_4] : memref<2x32xf32, #tpu.memory_space<vmem>>, vector<2x32xf32>
    %cst = arith.constant dense<0.000000e+00> : vector<2x32xf32>
    %3 = tpu.matmul %2, %0, %cst {dimension_numbers = #tpu.dot_dimension_numbers<[1], [0], [0], [1], [0, 0, 1, 1], [], []>} : vector<2x32xf32>, vector<32x32xf32>, vector<2x32xf32> -> vector<2x32xf32>
    %4 = vector.broadcast %1 : vector<1x32xf32> to vector<2x32xf32>
    %5 = arith.addf %3, %4 : vector<2x32xf32>
    %6 = math.tanh %5 : vector<2x32xf32>
    %c0_5 = arith.constant 0 : index
    %c0_6 = arith.constant 0 : index
    %7 = vector.load %arg2[%c0_5, %c0_6] : memref<16x32xf32, #tpu.memory_space<vmem>>, vector<16x32xf32>
    %cst_7 = arith.constant dense<0.000000e+00> : vector<16x32xf32>
    %8 = tpu.matmul %7, %0, %cst_7 {dimension_numbers = #tpu.dot_dimension_numbers<[1], [0], [0], [1], [0, 0, 1, 1], [], []>} : vector<16x32xf32>, vector<32x32xf32>, vector<16x32xf32> -> vector<16x32xf32>
    %9 = vector.broadcast %1 : vector<1x32xf32> to vector<16x32xf32>
    %10 = arith.addf %8, %9 : vector<16x32xf32>
    %11 = math.tanh %10 : vector<16x32xf32>
    %c0_8 = arith.constant 0 : index
    %c0_9 = arith.constant 0 : index
    %12 = vector.load %arg3[%c0_8, %c0_9] : memref<16x2xf32, #tpu.memory_space<vmem>>, vector<16x2xf32>
    %cst_10 = arith.constant dense<0.000000e+00> : vector<16x32xf32>
    %13 = tpu.matmul %12, %6, %cst_10 {dimension_numbers = #tpu.dot_dimension_numbers<[1], [0], [0], [1], [0, 0, 1, 1], [], []>} : vector<16x2xf32>, vector<2x32xf32>, vector<16x32xf32> -> vector<16x32xf32>
    %14 = arith.mulf %6, %6 : vector<2x32xf32>
    %cst_11 = arith.constant dense<0.000000e+00> : vector<2xf32>
    %15 = vector.multi_reduction <add>, %14, %cst_11 [1] : vector<2x32xf32> to vector<2xf32>
    %16 = vector.shape_cast %15 : vector<2xf32> to vector<2x1xf32>
    %cst_12 = arith.constant dense<0.000000e+00> : vector<16x1xf32>
    %17 = tpu.matmul %12, %16, %cst_12 {dimension_numbers = #tpu.dot_dimension_numbers<[1], [0], [0], [1], [0, 0, 1, 1], [], []>} : vector<16x2xf32>, vector<2x1xf32>, vector<16x1xf32> -> vector<16x1xf32>
    %18 = arith.mulf %13, %11 : vector<16x32xf32>
    %cst_13 = arith.constant dense<0.000000e+00> : vector<16xf32>
    %19 = vector.multi_reduction <add>, %18, %cst_13 [1] : vector<16x32xf32> to vector<16xf32>
    %20 = vector.shape_cast %19 : vector<16xf32> to vector<16x1xf32>
    %21 = arith.mulf %11, %11 : vector<16x32xf32>
    %cst_14 = arith.constant dense<0.000000e+00> : vector<16xf32>
    %22 = vector.multi_reduction <add>, %21, %cst_14 [1] : vector<16x32xf32> to vector<16xf32>
    %23 = vector.shape_cast %22 : vector<16xf32> to vector<16x1xf32>
    %24 = math.sqrt %17 : vector<16x1xf32>
    %25 = math.sqrt %23 : vector<16x1xf32>
    %26 = arith.mulf %24, %25 : vector<16x1xf32>
    %cst_15 = arith.constant 9.99999993E-9 : f32
    %27 = vector.broadcast %cst_15 : f32 to vector<16x1xf32>
    %28 = arith.maximumf %26, %27 : vector<16x1xf32>
    %29 = arith.divf %20, %28 : vector<16x1xf32>
    %30 = vector.shape_cast %29 : vector<16x1xf32> to vector<16x1xf32>
    %31 = vector.broadcast %30 : vector<16x1xf32> to vector<16x128xf32>
    %c0_16 = arith.constant 0 : index
    %c0_17 = arith.constant 0 : index
    %32 = vector.load %arg6[%c0_16, %c0_17] : memref<16x128xf32, #tpu.memory_space<vmem>>, vector<16x128xf32>
    tpu.vector_store %arg6[%c0_16, %c0_17], %31 {strides = array<i32>} : memref<16x128xf32, #tpu.memory_space<vmem>>, vector<16x128xf32>,
    return
  }
  func.func @transform_0(%arg0: i32) -> (i32, i32) {
    %c0_i32 = arith.constant 0 : i32
    %c0_i32_0 = arith.constant 0 : i32
    %c0_i32_1 = arith.constant 0 : i32
    return %c0_i32, %c0_i32_0 : i32, i32
  }
  func.func @transform_1(%arg0: i32) -> (i32, i32) {
    %c0_i32 = arith.constant 0 : i32
    %c0_i32_0 = arith.constant 0 : i32
    %c0_i32_1 = arith.constant 0 : i32
    return %c0_i32, %c0_i32_0 : i32, i32
  }
  func.func @transform_2(%arg0: i32) -> (i32, i32) {
    %c0_i32 = arith.constant 0 : i32
    %c0_i32_0 = arith.constant 0 : i32
    %c0_i32_1 = arith.constant 0 : i32
    return %c0_i32, %c0_i32_0 : i32, i32
  }
  func.func @transform_3(%arg0: i32) -> (i32, i32) {
    %c0_i32 = arith.constant 0 : i32
    %c0_i32_0 = arith.constant 0 : i32
    %c0_i32_1 = arith.constant 0 : i32
    return %c0_i32, %c0_i32_0 : i32, i32
  }
  func.func @transform_4(%arg0: i32) -> (i32, i32) {
    %c0_i32 = arith.constant 0 : i32
    %c0_i32_0 = arith.constant 0 : i32
    %c0_i32_1 = arith.constant 0 : i32
    return %c0_i32, %c0_i32_0 : i32, i32
  }
  func.func @transform_5(%arg0: i32) -> (i32, i32) {
    %c0_i32 = arith.constant 0 : i32
    %c0_i32_0 = arith.constant 0 : i32
    %c0_i32_1 = arith.constant 0 : i32
    return %c0_i32, %c0_i32_0 : i32, i32
  }
}

</mosaic_0001>

<llo_original>
// kernel: squeeze.21
$region0: #{squeeze.21}
  %s0 = inlined_call_operand.vmem [shape: f32[12], index: 0, kind: input, shape index: {}]
  %s1 = inlined_call_operand.vmem [shape: f32[6,2], index: 1, kind: output, shape index: {}]
  $region1: #{squeeze.21} parent=0
    #allocation0 [shape = 'u8[4096]{0}', space=vmem, size = 0x1000, scoped, tag = 'scoped mem for input reshape']
    %s3 = sshll.u32 1, 1
    %s4 = ssub.s32 %s3, 1
    %v5 = vld [vmem:[%s0] sm:%s4]
    %6 = vst [vmem:[#allocation0] sm:%s4] %v5
    %v7 = vld [vmem:[#allocation0] sm:$0x1]
    %vm8 = vcmask 15360
    %9 = vst.msk [vmem:[%s1] sm:$0x1] %vm8, %v7
    %v10 = vld [vmem:[#allocation0] sm:$0x1]
    %11 = vrot.lane.b32.xlu0 %v10, 126
    %v12 = vpop.permute.xlu0 %11
    %vm13 = vcmask 15360
    %s14 = scalar_lea.vmem %s1, 1
    %15 = vst.msk [vmem:[%s14] sm:$0x1] %vm13, %v12
    %v16 = vld [vmem:[#allocation0] sm:$0x1]
    %17 = vrot.lane.b32.xlu0 %v16, 124
    %v18 = vpop.permute.xlu0 %17
    %vm19 = vcmask 15360
    %s20 = scalar_lea.vmem %s1, 2
    %21 = vst.msk [vmem:[%s20] sm:$0x1] %vm19, %v18
    %v22 = vld [vmem:[#allocation0] sm:$0x1]
    %23 = vrot.lane.b32.xlu0 %v22, 122
    %v24 = vpop.permute.xlu0 %23
    %vm25 = vcmask 15360
    %s26 = scalar_lea.vmem %s1, 3
    %27 = vst.msk [vmem:[%s26] sm:$0x1] %vm25, %v24
    %v28 = vld [vmem:[#allocation0] sm:$0x1]
    %29 = vrot.lane.b32.xlu0 %v28, 120
    %v30 = vpop.permute.xlu0 %29
    %vm31 = vcmask 15360
    %s32 = scalar_lea.vmem %s1, 4
    %33 = vst.msk [vmem:[%s32] sm:$0x1] %vm31, %v30
    %v34 = vld [vmem:[#allocation0] sm:$0x1]
    %35 = vrot.lane.b32.xlu0 %v34, 118
    %v36 = vpop.permute.xlu0 %35
    %vm37 = vcmask 15360
    %s38 = scalar_lea.vmem %s1, 5
    %39 = vst.msk [vmem:[%s38] sm:$0x1] %vm37, %v36

// kernel: rank_using_previous_context.1
$region0: #{rank_using_previous_context.1}
  #allocation0 [shape = 'u32[]', space=smem, size = 0x4, offset = 0x4, fixed_abs, tag = 'smem constant byte address 0x4 - core index']
  #allocation1 [shape = 'u32[144,128]{1,0:T(1,128)}', space=vmem, size = 0x12000, scoped, tag = 'internal scratch']
  %s0 = inlined_call_operand.vmem [shape: f32[2,32], index: 0, kind: input, shape index: {}]
  %s1 = inlined_call_operand.vmem [shape: f32[16,32], index: 1, kind: input, shape index: {}]
  %s2 = inlined_call_operand.vmem [shape: f32[16,2], index: 2, kind: input, shape index: {}]
  %s3 = inlined_call_operand.vmem [shape: f32[32,32], index: 3, kind: input, shape index: {}]
  %s4 = inlined_call_operand.vmem [shape: f32[1,32], index: 4, kind: input, shape index: {}]
  %s5 = inlined_call_operand.vmem [shape: f32[16,128], index: 5, kind: output, shape index: {}]
  %s6 = sld [smem:[#allocation0]]
  $region30: #{rank_using_previous_context.1} parent=0
    _
  %s8 = ssub.s32 1, %s6
  %s9 = scalar_select 0, %s8, %s6
  // Predicated region
  $region2: #{rank_using_previous_context.1} parent=0 // pred_check
    _
  $region3: #{rank_using_previous_context.1} parent=0 // pred_check_branch
    %11 = sbr.rel (0) target = $region5
  $region4: #{rank_using_previous_context.1} parent=0 // pred_region
    _
  $region5: #{rank_using_previous_context.1} parent=0 // pred_fallthru
    _
  // Predicated region
  $region6: #{rank_using_previous_context.1} parent=0 // pred_check
    _
  $region7: #{rank_using_previous_context.1} parent=0 // pred_check_branch
    %13 = sbr.rel (0) target = $region9
  $region8: #{rank_using_previous_context.1} parent=0 // pred_region
    _
  $region9: #{rank_using_previous_context.1} parent=0 // pred_fallthru
    _
  // Predicated region
  $region10: #{rank_using_previous_context.1} parent=0 // pred_check
    _
  $region11: #{rank_using_previous_context.1} parent=0 // pred_check_branch
    %15 = sbr.rel (0) target = $region13
  $region12: #{rank_using_previous_context.1} parent=0 // pred_region
    _
  $region13: #{rank_using_previous_context.1} parent=0 // pred_fallthru
    _
  // Predicated region
  $region14: #{rank_using_previous_context.1} parent=0 // pred_check
    _
  $region15: #{rank_using_previous_context.1} parent=0 // pred_check_branch
    %17 = sbr.rel (0) target = $region17
  $region16: #{rank_using_previous_context.1} parent=0 // pred_region
    _
  $region17: #{rank_using_previous_context.1} parent=0 // pred_fallthru
    _
  // Predicated region
  $region18: #{rank_using_previous_context.1} parent=0 // pred_check
    _
  $region19: #{rank_using_previous_context.1} parent=0 // pred_check_branch
    %19 = sbr.rel (0) target = $region21
  $region20: #{rank_using_previous_context.1} parent=0 // pred_region
    _
  $region21: #{rank_using_previous_context.1} parent=0 // pred_fallthru
    _
  %v20 = vld [vmem:[%s3] sm:$0xff]
  %v21 = vld [vmem:[%s3 + $0x8] sm:$0xff]
  %v22 = vld [vmem:[%s3 + $0x10] sm:$0xff]
  %v23 = vld [vmem:[%s3 + $0x18] sm:$0xff]
  %v24 = vld [vmem:[%s4] sm:$0x1]
  %v25 = vld [vmem:[%s0] sm:$0x3]
  %v27 = vlaneseq
  %v28 = vshrl.u32 %v27, 7
  %v29 = vsub.s32 0, %v28
  %v30 = vrot.slane %v24, %v29
  %vm32 = vcmask 261120
  %v34 = vsel %vm32, %v25, 0
  %36 = vmatprep.subr.mxu0 0.0
  %37 = vmatpush1.msra.mxu0 0.0
  %38 = vmatprep.subr.mxu0 0.0
  %39 = vmatpush1.msra.mxu0 0.0
  %40 = vmatprep.subr.mxu0 0.0
  %41 = vmatpush1.msra.mxu0 0.0
  %42 = vmatprep.subr.mxu0 0.0
  %43 = vmatpush1.msra.mxu0 0.0
  %44 = vmatprep.subr.mxu0 0.0
  %45 = vmatpush1.msra.mxu0 0.0
  %46 = vmatprep.subr.mxu0 0.0
  %47 = vmatpush1.msra.mxu0 0.0
  %48 = vmatprep.subr.mxu0 0.0
  %49 = vmatpush1.msra.mxu0 0.0
  %50 = vmatprep.subr.mxu0 0.0
  %51 = vmatpush1.msra.mxu0 0.0
  %52 = vmatprep.subr.mxu0 0.0
  %53 = vmatpush1.msra.mxu0 0.0
  %54 = vmatprep.subr.mxu0 0.0
  %55 = vmatpush1.msra.mxu0 0.0
  %56 = vmatprep.subr.mxu0 0.0
  %57 = vmatpush1.msra.mxu0 0.0
  %58 = vmatprep.subr.mxu0 0.0
  %59 = vmatpush1.msra.mxu0 0.0
  %60 = vmatprep.subr.mxu0 0.0
  %61 = vmatpush1.msra.mxu0 %v23
  %62 = vmatprep.subr.mxu0 0.0
  %63 = vmatpush1.msra.mxu0 %v22
  %64 = vmatprep.subr.mxu0 0.0
  %65 = vmatpush1.msra.mxu0 %v21
  %66 = vmatprep.subr.mxu0 0.0
  %67 = vmatpush1.msra.mxu0 %v20
  %68 = vmatprep.subr.mxu0 0.0
  %69 = vmatpush2.msra.mxu0 0.0
  %70 = vmatprep.subr.mxu0 0.0
  %71 = vmatpush2.msra.mxu0 0.0
  %72 = vmatprep.subr.mxu0 0.0
  %73 = vmatpush2.msra.mxu0 0.0
  %74 = vmatprep.subr.mxu0 0.0
  %75 = vmatpush2.msra.mxu0 0.0
  %76 = vmatprep.subr.mxu0 0.0
  %77 = vmatpush2.msra.mxu0 0.0
  %78 = vmatprep.subr.mxu0 0.0
  %79 = vmatpush2.msra.mxu0 0.0
  %80 = vmatprep.subr.mxu0 0.0
  %81 = vmatpush2.msra.mxu0 0.0
  %82 = vmatprep.subr.mxu0 0.0
  %83 = vmatpush2.msra.mxu0 0.0
  %84 = vmatprep.subr.mxu0 0.0
  %85 = vmatpush2.msra.mxu0 0.0
  %86 = vmatprep.subr.mxu0 0.0
  %87 = vmatpush2.msra.mxu0 0.0
  %88 = vmatprep.subr.mxu0 0.0
  %89 = vmatpush2.msra.mxu0 0.0
  %90 = vmatprep.subr.mxu0 0.0
  %91 = vmatpush2.msra.mxu0 0.0
  %92 = vmatprep.subr.mxu0 0.0
  %93 = vmatpush2.msra.mxu0 0.0
  %94 = vmatprep.subr.mxu0 0.0
  %95 = vmatpush2.msra.mxu0 0.0
  %96 = vmatprep.subr.mxu0 0.0
  %97 = vmatpush2.msra.mxu0 0.0
  %98 = vmatprep.subr.mxu0 0.0
  %99 = vmatpush2.msra.mxu0 0.0
  %100 = vmatprep.mubr.f32.mxu0 0.0
  %101 = vmatmul.mubr.f32.gmra.mxu0 %v34
  %v102 = vpop.f32.mrf.mxu0
  %v103 = vadd.f32 %v30, %v102
  %v104 = vpop.f32.mrf.mxu0
  %105 = vdwg.mxu0
  %v106 = vtanh.pop %v103
  %v107 = vld [vmem:[%s1] sm:$0xff]
  %v108 = vld [vmem:[%s1 + $0x8] sm:$0xff]
  %v110 = vsel %vm32, %v107, 0
  %v113 = vsel %vm32, %v108, 0
  %115 = vmatprep.subr.mxu0 0.0
  %116 = vmatpush1.msra.mxu0 0.0
  %117 = vmatprep.subr.mxu0 0.0
  %118 = vmatpush1.msra.mxu0 0.0
  %119 = vmatprep.subr.mxu0 0.0
  %120 = vmatpush1.msra.mxu0 0.0
  %121 = vmatprep.subr.mxu0 0.0
  %122 = vmatpush1.msra.mxu0 0.0
  %123 = vmatprep.subr.mxu0 0.0
  %124 = vmatpush1.msra.mxu0 0.0
  %125 = vmatprep.subr.mxu0 0.0
  %126 = vmatpush1.msra.mxu0 0.0
  %127 = vmatprep.subr.mxu0 0.0
  %128 = vmatpush1.msra.mxu0 0.0
  %129 = vmatprep.subr.mxu0 0.0
  %130 = vmatpush1.msra.mxu0 0.0
  %131 = vmatprep.subr.mxu0 0.0
  %132 = vmatpush1.msra.mxu0 0.0
  %133 = vmatprep.subr.mxu0 0.0
  %134 = vmatpush1.msra.mxu0 0.0
  %135 = vmatprep.subr.mxu0 0.0
  %136 = vmatpush1.msra.mxu0 0.0
  %137 = vmatprep.subr.mxu0 0.0
  %138 = vmatpush1.msra.mxu0 0.0
  %139 = vmatprep.subr.mxu0 0.0
  %140 = vmatpush1.msra.mxu0 %v23
  %141 = vmatprep.subr.mxu0 0.0
  %142 = vmatpush1.msra.mxu0 %v22
  %143 = vmatprep.subr.mxu0 0.0
  %144 = vmatpush1.msra.mxu0 %v21
  %145 = vmatprep.subr.mxu0 0.0
  %146 = vmatpush1.msra.mxu0 %v20
  %147 = vmatprep.subr.mxu0 0.0
  %148 = vmatpush2.msra.mxu0 0.0
  %149 = vmatprep.subr.mxu0 0.0
  %150 = vmatpush2.msra.mxu0 0.0
  %151 = vmatprep.subr.mxu0 0.0
  %152 = vmatpush2.msra.mxu0 0.0
  %153 = vmatprep.subr.mxu0 0.0
  %154 = vmatpush2.msra.mxu0 0.0
  %155 = vmatprep.subr.mxu0 0.0
  %156 = vmatpush2.msra.mxu0 0.0
  %157 = vmatprep.subr.mxu0 0.0
  %158 = vmatpush2.msra.mxu0 0.0
  %159 = vmatprep.subr.mxu0 0.0
  %160 = vmatpush2.msra.mxu0 0.0
  %161 = vmatprep.subr.mxu0 0.0
  %162 = vmatpush2.msra.mxu0 0.0
  %163 = vmatprep.subr.mxu0 0.0
  %164 = vmatpush2.msra.mxu0 0.0
  %165 = vmatprep.subr.mxu0 0.0
  %166 = vmatpush2.msra.mxu0 0.0
  %167 = vmatprep.subr.mxu0 0.0
  %168 = vmatpush2.msra.mxu0 0.0
  %169 = vmatprep.subr.mxu0 0.0
  %170 = vmatpush2.msra.mxu0 0.0
  %171 = vmatprep.subr.mxu0 0.0
  %172 = vmatpush2.msra.mxu0 0.0
  %173 = vmatprep.subr.mxu0 0.0
  %174 = vmatpush2.msra.mxu0 0.0
  %175 = vmatprep.subr.mxu0 0.0
  %176 = vmatpush2.msra.mxu0 0.0
  %177 = vmatprep.subr.mxu0 0.0
  %178 = vmatpush2.msra.mxu0 0.0
  %179 = vmatprep.mubr.f32.mxu0 0.0
  %180 = vmatmul.mubr.f32.gmra.mxu0 %v110
  %v181 = vpop.f32.mrf.mxu0
  %v182 = vadd.f32 %v30, %v181
  %v183 = vpop.f32.mrf.mxu0
  %184 = vmatprep.mubr.f32.mxu0 0.0
  %185 = vmatmul.mubr.f32.gmra.mxu0 %v113
  %v186 = vpop.f32.mrf.mxu0
  %v187 = vadd.f32 %v30, %v186
  %v188 = vpop.f32.mrf.mxu0
  %189 = vdwg.mxu0
  %v190 = vtanh.pop %v182
  %v191 = vtanh.pop %v187
  %v192 = vld [vmem:[%s2] sm:$0xff]
  %v193 = vld [vmem:[%s2 + $0x8] sm:$0xff]
  %vm194 = vcmask 15360
  %v196 = vsel %vm194, %v192, 0
  %v199 = vsel %vm194, %v193, 0
  %vm201 = vcmask 1041408
  %v203 = vsel %vm201, %v106, 0
  %205 = vmatprep.subr.mxu0 0.0
  %206 = vmatpush1.msra.mxu0 0.0
  %207 = vmatprep.subr.mxu0 0.0
  %208 = vmatpush1.msra.mxu0 0.0
  %209 = vmatprep.subr.mxu0 0.0
  %210 = vmatpush1.msra.mxu0 0.0
  %211 = vmatprep.subr.mxu0 0.0
  %212 = vmatpush1.msra.mxu0 0.0
  %213 = vmatprep.subr.mxu0 0.0
  %214 = vmatpush1.msra.mxu0 0.0
  %215 = vmatprep.subr.mxu0 0.0
  %216 = vmatpush1.msra.mxu0 0.0
  %217 = vmatprep.subr.mxu0 0.0
  %218 = vmatpush1.msra.mxu0 0.0
  %219 = vmatprep.subr.mxu0 0.0
  %220 = vmatpush1.msra.mxu0 0.0
  %221 = vmatprep.subr.mxu0 0.0
  %222 = vmatpush1.msra.mxu0 0.0
  %223 = vmatprep.subr.mxu0 0.0
  %224 = vmatpush1.msra.mxu0 0.0
  %225 = vmatprep.subr.mxu0 0.0
  %226 = vmatpush1.msra.mxu0 0.0
  %227 = vmatprep.subr.mxu0 0.0
  %228 = vmatpush1.msra.mxu0 0.0
  %229 = vmatprep.subr.mxu0 0.0
  %230 = vmatpush1.msra.mxu0 0.0
  %231 = vmatprep.subr.mxu0 0.0
  %232 = vmatpush1.msra.mxu0 0.0
  %233 = vmatprep.subr.mxu0 0.0
  %234 = vmatpush1.msra.mxu0 0.0
  %235 = vmatprep.subr.mxu0 0.0
  %236 = vmatpush1.msra.mxu0 %v203
  %237 = vmatprep.subr.mxu0 0.0
  %238 = vmatpush2.msra.mxu0 0.0
  %239 = vmatprep.subr.mxu0 0.0
  %240 = vmatpush2.msra.mxu0 0.0
  %241 = vmatprep.subr.mxu0 0.0
  %242 = vmatpush2.msra.mxu0 0.0
  %243 = vmatprep.subr.mxu0 0.0
  %244 = vmatpush2.msra.mxu0 0.0
  %245 = vmatprep.subr.mxu0 0.0
  %246 = vmatpush2.msra.mxu0 0.0
  %247 = vmatprep.subr.mxu0 0.0
  %248 = vmatpush2.msra.mxu0 0.0
  %249 = vmatprep.subr.mxu0 0.0
  %250 = vmatpush2.msra.mxu0 0.0
  %251 = vmatprep.subr.mxu0 0.0
  %252 = vmatpush2.msra.mxu0 0.0
  %253 = vmatprep.subr.mxu0 0.0
  %254 = vmatpush2.msra.mxu0 0.0
  %255 = vmatprep.subr.mxu0 0.0
  %256 = vmatpush2.msra.mxu0 0.0
  %257 = vmatprep.subr.mxu0 0.0
  %258 = vmatpush2.msra.mxu0 0.0
  %259 = vmatprep.subr.mxu0 0.0
  %260 = vmatpush2.msra.mxu0 0.0
  %261 = vmatprep.subr.mxu0 0.0
  %262 = vmatpush2.msra.mxu0 0.0
  %263 = vmatprep.subr.mxu0 0.0
  %264 = vmatpush2.msra.mxu0 0.0
  %265 = vmatprep.subr.mxu0 0.0
  %266 = vmatpush2.msra.mxu0 0.0
  %267 = vmatprep.subr.mxu0 0.0
  %268 = vmatpush2.msra.mxu0 0.0
  %269 = vmatprep.mubr.f32.mxu0 0.0
  %270 = vmatmul.mubr.f32.gmra.mxu0 %v196
  %v271 = vpop.f32.mrf.mxu0
  %v272 = vadd.f32 0.0, %v271
  %v273 = vpop.f32.mrf.mxu0
  %274 = vmatprep.mubr.f32.mxu0 0.0
  %275 = vmatmul.mubr.f32.gmra.mxu0 %v199
  %v276 = vpop.f32.mrf.mxu0
  %v277 = vadd.f32 0.0, %v276
  %v278 = vpop.f32.mrf.mxu0
  %279 = vdwg.mxu0
  %v280 = vmul.f32 %v106, %v106
  %vm281 = vcmask 254976
  %v282 = vsel %vm281, %v280, 0.0
  %283 = vadd.xlane.f32.xlu0 %v282
  %v284 = vpop.xlane.xlu0 %283
  %v286 = vsel %vm201, %v284, 0
  %288 = vmatprep.subr.mxu0 0.0
  %289 = vmatpush1.msra.mxu0 0.0
  %290 = vmatprep.subr.mxu0 0.0
  %291 = vmatpush1.msra.mxu0 0.0
  %292 = vmatprep.subr.mxu0 0.0
  %293 = vmatpush1.msra.mxu0 0.0
  %294 = vmatprep.subr.mxu0 0.0
  %295 = vmatpush1.msra.mxu0 0.0
  %296 = vmatprep.subr.mxu0 0.0
  %297 = vmatpush1.msra.mxu0 0.0
  %298 = vmatprep.subr.mxu0 0.0
  %299 = vmatpush1.msra.mxu0 0.0
  %300 = vmatprep.subr.mxu0 0.0
  %301 = vmatpush1.msra.mxu0 0.0
  %302 = vmatprep.subr.mxu0 0.0
  %303 = vmatpush1.msra.mxu0 0.0
  %304 = vmatprep.subr.mxu0 0.0
  %305 = vmatpush1.msra.mxu0 0.0
  %306 = vmatprep.subr.mxu0 0.0
  %307 = vmatpush1.msra.mxu0 0.0
  %308 = vmatprep.subr.mxu0 0.0
  %309 = vmatpush1.msra.mxu0 0.0
  %310 = vmatprep.subr.mxu0 0.0
  %311 = vmatpush1.msra.mxu0 0.0
  %312 = vmatprep.subr.mxu0 0.0
  %313 = vmatpush1.msra.mxu0 0.0
  %314 = vmatprep.subr.mxu0 0.0
  %315 = vmatpush1.msra.mxu0 0.0
  %316 = vmatprep.subr.mxu0 0.0
  %317 = vmatpush1.msra.mxu0 0.0
  %318 = vmatprep.subr.mxu0 0.0
  %319 = vmatpush1.msra.mxu0 %v286
  %320 = vmatprep.subr.mxu0 0.0
  %321 = vmatpush2.msra.mxu0 0.0
  %322 = vmatprep.subr.mxu0 0.0
  %323 = vmatpush2.msra.mxu0 0.0
  %324 = vmatprep.subr.mxu0 0.0
  %325 = vmatpush2.msra.mxu0 0.0
  %326 = vmatprep.subr.mxu0 0.0
  %327 = vmatpush2.msra.mxu0 0.0
  %328 = vmatprep.subr.mxu0 0.0
  %329 = vmatpush2.msra.mxu0 0.0
  %330 = vmatprep.subr.mxu0 0.0
  %331 = vmatpush2.msra.mxu0 0.0
  %332 = vmatprep.subr.mxu0 0.0
  %333 = vmatpush2.msra.mxu0 0.0
  %334 = vmatprep.subr.mxu0 0.0
  %335 = vmatpush2.msra.mxu0 0.0
  %336 = vmatprep.subr.mxu0 0.0
  %337 = vmatpush2.msra.mxu0 0.0
  %338 = vmatprep.subr.mxu0 0.0
  %339 = vmatpush2.msra.mxu0 0.0
  %340 = vmatprep.subr.mxu0 0.0
  %341 = vmatpush2.msra.mxu0 0.0
  %342 = vmatprep.subr.mxu0 0.0
  %343 = vmatpush2.msra.mxu0 0.0
  %344 = vmatprep.subr.mxu0 0.0
  %345 = vmatpush2.msra.mxu0 0.0
  %346 = vmatprep.subr.mxu0 0.0
  %347 = vmatpush2.msra.mxu0 0.0
  %348 = vmatprep.subr.mxu0 0.0
  %349 = vmatpush2.msra.mxu0 0.0
  %350 = vmatprep.subr.mxu0 0.0
  %351 = vmatpush2.msra.mxu0 0.0
  %352 = vmatprep.mubr.f32.mxu0 0.0
  %353 = vmatmul.mubr.f32.gmra.mxu0 %v196
  %v354 = vpop.f32.mrf.mxu0
  %v355 = vadd.f32 0.0, %v354
  %v356 = vpop.f32.mrf.mxu0
  %357 = vmatprep.mubr.f32.mxu0 0.0
  %358 = vmatmul.mubr.f32.gmra.mxu0 %v199
  %v359 = vpop.f32.mrf.mxu0
  %v360 = vadd.f32 0.0, %v359
  %v361 = vpop.f32.mrf.mxu0
  %362 = vdwg.mxu0
  %v363 = vmul.f32 %v272, %v190
  %v364 = vmul.f32 %v277, %v191
  %v365 = vsel %vm32, %v363, 0.0
  %366 = vadd.xlane.f32.xlu0 %v365
  %v367 = vpop.xlane.xlu0 %366
  %v368 = vsel %vm32, %v364, 0.0
  %369 = vadd.xlane.f32.xlu0 %v368
  %v370 = vpop.xlane.xlu0 %369
  %v371 = vmul.f32 %v190, %v190
  %v372 = vmul.f32 %v191, %v191
  %v373 = vsel %vm32, %v371, 0.0
  %374 = vadd.xlane.f32.xlu0 %v373
  %v375 = vpop.xlane.xlu0 %374
  %v376 = vsel %vm32, %v372, 0.0
  %377 = vadd.xlane.f32.xlu0 %v376
  %v378 = vpop.xlane.xlu0 %377
  %v379 = vrsqrt.pop %v355
  %v380 = vmul.f32 %v355, %v379
  %vm381 = vcmp.eq.f32.partialorder %v355, inf
  %v382 = vsel %vm381, %v355, %v380
  %vm383 = vcmp.eq.f32.partialorder %v355, 0.0
  %v384 = vand.u32 %v355, 2147483648
  %v385 = vsel %vm383, %v384, %v382
  %v386 = vrsqrt.pop %v360
  %v387 = vmul.f32 %v360, %v386
  %vm388 = vcmp.eq.f32.partialorder %v360, inf
  %v389 = vsel %vm388, %v360, %v387
  %vm390 = vcmp.eq.f32.partialorder %v360, 0.0
  %v391 = vand.u32 %v360, 2147483648
  %v392 = vsel %vm390, %v391, %v389
  %v393 = vrsqrt.pop %v375
  %v394 = vmul.f32 %v375, %v393
  %vm395 = vcmp.eq.f32.partialorder %v375, inf
  %v396 = vsel %vm395, %v375, %v394
  %vm397 = vcmp.eq.f32.partialorder %v375, 0.0
  %v398 = vand.u32 %v375, 2147483648
  %v399 = vsel %vm397, %v398, %v396
  %v400 = vrsqrt.pop %v378
  %v401 = vmul.f32 %v378, %v400
  %vm402 = vcmp.eq.f32.partialorder %v378, inf
  %v403 = vsel %vm402, %v378, %v401
  %vm404 = vcmp.eq.f32.partialorder %v378, 0.0
  %v405 = vand.u32 %v378, 2147483648
  %v406 = vsel %vm404, %v405, %v403
  %v407 = vmul.f32 %v385, %v399
  %v408 = vmul.f32 %v392, %v406
  %v409 = vmax.f32 %v407, 1e-08
  %v410 = vmax.f32 %v408, 1e-08
  %v411 = vrcp.pop %v409
  %v412 = vmul.f32 %v367, %v411
  %v413 = vrcp.pop %v410
  %v414 = vmul.f32 %v370, %v413
  %416 = vset.pattern.permute.xlu0 0
  %417 = vperm.xlu0 %416, %v412
  %v418 = vpop.permute.xlu0 %417
  %421 = vset.pattern.permute.xlu0 0
  %422 = vperm.xlu0 %421, %v414
  %v423 = vpop.permute.xlu0 %422
  %425 = vst [vmem:[%s5] sm:$0xff] %v418
  %426 = vst [vmem:[%s5 + $0x8] sm:$0xff] %v423
  // Predicated region
  $region22: #{rank_using_previous_context.1} parent=0 // pred_check
    _
  $region23: #{rank_using_previous_context.1} parent=0 // pred_check_branch
    %428 = sbr.rel (0) target = $region25
  $region24: #{rank_using_previous_context.1} parent=0 // pred_region
    _
  $region25: #{rank_using_previous_context.1} parent=0 // pred_fallthru
    _
  // Predicated region
  $region26: #{rank_using_previous_context.1} parent=0 // pred_check
    _
  $region27: #{rank_using_previous_context.1} parent=0 // pred_check_branch
    %430 = sbr.rel (0) target = $region29
  $region28: #{rank_using_previous_context.1} parent=0 // pred_region
    _
  $region29: #{rank_using_previous_context.1} parent=0 // pred_fallthru
    _

</llo_original>
